<compile_context>
chip_gen: v7x
topology: tpu7x:2x2x1
jax: 0.10.0
libtpu: 0.0.40
codegen_flags: <defaults>
</compile_context>

<pallas_src>
import functools
import math

import jax
import jax.numpy as jnp
from jax.experimental import pallas as pl
from jax.experimental.pallas import tpu as pltpu

LANE = 128
SUBLANE = 8

_ARBITRARY = getattr(pltpu, "ARBITRARY", "arbitrary")
_CORE_PARALLEL = getattr(pltpu, "CORE_PARALLEL", "parallel")


def _round_up(x, m):
    return ((x + m - 1) // m) * m


def _num_tensorcores():
    """2 TensorCores per chip on v7x; 1 on v5e/v6e (older generations expose
    their cores as separate JAX devices, so 1 is correct there too)."""
    try:
        kind = jax.devices()[0].device_kind.lower()
    except Exception:
        return 1
    if "7x" in kind or "v7" in kind:
        return 2
    return 1


def _adv_kernel(s_ref, t_ref, out_ref, *, adv_type, inv_total, tr, n_tiles,
                rows, need_mask):
    """Grid = (n_cores, n_tiles); axis 1 is the reduction axis."""
    c = pl.program_id(0)
    i = pl.program_id(1)

    @pl.when(i == 0)
    def _():
        out_ref[...] = jnp.zeros_like(out_ref)

    s = s_ref[...].astype(jnp.float32)
    t = t_ref[...].astype(jnp.float32)

    if adv_type == "hinge":
        # relu(1 - T) + relu(1 + S); padded / masked elements contribute 0.
        contrib = jnp.maximum(1.0 - t, 0.0) + jnp.maximum(1.0 + s, 0.0)
    else:  # "wgan-gp"
        contrib = s - t

    if need_mask:
        # Mask every row at/after `rows`: partial last tile and any tile that
        # was clamped by the index_map reads garbage there — discard it.
        row0 = (c * n_tiles + i) * tr
        row_ids = row0 + jax.lax.broadcasted_iota(jnp.int32, (tr, LANE), 0)
        contrib = jnp.where(row_ids < rows, contrib, 0.0)

    # Reduce across vreg row-groups only (pure VPU adds); keep the partial
    # sums lane/sublane resident in this core's (8, 128) output block.
    out_ref[...] += contrib.reshape(tr // SUBLANE, SUBLANE, LANE).sum(axis=0)

    @pl.when(i == pl.num_programs(1) - 1)
    def _():
        # Fuse the cross-lane reduce here (XLU is idle in this HBM-bound
        # kernel): leave a single scaled scalar at [0, 0], zeros elsewhere.
        core_total = jnp.sum(out_ref[...]) * inv_total
        sub = jax.lax.broadcasted_iota(jnp.int32, (SUBLANE, LANE), 0)
        lane = jax.lax.broadcasted_iota(jnp.int32, (SUBLANE, LANE), 1)
        out_ref[...] = jnp.where((sub == 0) & (lane == 0), core_total, 0.0)


@functools.partial(jax.jit, static_argnames=("adv_type", "tr_max", "n_cores"))
def _criterion_adv_impl(d_out_S, d_out_T, *, adv_type, tr_max, n_cores):
    total = math.prod(d_out_S.shape)

    # Loss-neutral values for the (< 128-element) ragged tail.
    if adv_type == "hinge":
        s_pad_val, t_pad_val = -1.0, 1.0
    else:
        s_pad_val, t_pad_val = 0.0, 0.0

    rows = pl.cdiv(total, LANE)
    padded_len = rows * LANE

    def _as_slab(x, pad_value):
        flat = x.reshape(-1)
        if padded_len > total:
            # Only a sub-128-element tail ever gets wrapper padding; all other
            # raggedness is masked inside the kernel.
            pad = jnp.full((padded_len - total,), pad_value, dtype=flat.dtype)
            flat = jnp.concatenate([flat, pad])
        return flat.reshape(rows, LANE)

    s2 = _as_slab(d_out_S, s_pad_val)
    t2 = _as_slab(d_out_T, t_pad_val)

    # Keep tiny inputs on a single core so every core owns some valid rows.
    n_cores = n_cores if rows >= n_cores * 16 else 1
    tr = min(tr_max, _round_up(pl.cdiv(rows, n_cores), 16))
    n_tiles = pl.cdiv(rows, n_cores * tr)
    need_mask = (n_cores * n_tiles * tr) != rows
    # Clamp block indices so no DMA window starts past the array (fully
    # out-of-range tiles read valid memory and are fully masked in-kernel).
    max_block = (rows - 1) // tr

    def in_map(c, i):
        return (jnp.minimum(c * n_tiles + i, max_block), 0)

    kernel = functools.partial(
        _adv_kernel, adv_type=adv_type, inv_total=1.0 / float(total),
        tr=tr, n_tiles=n_tiles, rows=rows, need_mask=need_mask)

    itemsize = jnp.dtype(d_out_S.dtype).itemsize
    cost = pl.CostEstimate(flops=5 * total, transcendentals=0,
                           bytes_accessed=int(2 * total * itemsize))

    # 2 inputs x 2 pipeline buffers per block, plus headroom for in-kernel
    # temporaries; well under physical VMEM on v5e/v6e (128 MiB) and v7x (64).
    block_bytes = tr * LANE * itemsize
    vmem_limit = int(min(48 << 20, max(16 << 20, 4 * block_bytes + (16 << 20))))

    if n_cores > 1:
        dim_sem = (_CORE_PARALLEL, _ARBITRARY)   # shard rows across v7x TCs
    else:
        dim_sem = (_ARBITRARY, _ARBITRARY)

    partials = pl.pallas_call(
        kernel,
        out_shape=jax.ShapeDtypeStruct((n_cores * SUBLANE, LANE), jnp.float32),
        grid_spec=pltpu.PrefetchScalarGridSpec(
            num_scalar_prefetch=0,
            grid=(n_cores, n_tiles),
            in_specs=[
                pl.BlockSpec((tr, LANE), in_map),
                pl.BlockSpec((tr, LANE), in_map),
            ],
            out_specs=pl.BlockSpec((SUBLANE, LANE), lambda c, i: (c, 0)),
        ),
        compiler_params=pltpu.CompilerParams(
            dimension_semantics=dim_sem,
            vmem_limit_bytes=vmem_limit),
        cost_estimate=cost,
    )(s2, t2)

    # Each core wrote a single scaled scalar (rest zeros); tiny fused sum.
    return jnp.sum(partials)


def criterion_adv(d_out_S, d_out_T, adv_type, *, tr_max=8192, n_cores=None):
    if adv_type not in ("wgan-gp", "hinge"):
        raise ValueError("adv_type should be wgan-gp or hinge")
    assert d_out_S.shape == d_out_T.shape, (
        "the output dim of D with teacher and student as input differ")
    if n_cores is None:
        n_cores = _num_tensorcores()
    return _criterion_adv_impl(d_out_S, d_out_T, adv_type=adv_type,
                               tr_max=int(tr_max), n_cores=int(n_cores))


def criterion_adv_ref(d_out_S, d_out_T, adv_type):
    """Pure-JAX reference mirroring the PyTorch module."""
    s = d_out_S.astype(jnp.float32)
    t = d_out_T.astype(jnp.float32)
    if adv_type == "wgan-gp":
        return -jnp.mean(t) + jnp.mean(s)
    return (jnp.mean(jnp.maximum(1.0 - t, 0.0)) +
            jnp.mean(jnp.maximum(1.0 + s, 0.0)))


if __name__ == "__main__":
    key = jax.random.PRNGKey(0)
    k_s, k_t = jax.random.split(key)

    ok = True
    # Discriminator outputs, NCHW.
    #  - (2,4,16,16):  element count multiple of 128 (zero-copy path)
    #  - (2,3,17,13):  ragged tail (<128) + partial tile masking
    #  - (2,1,65,67) with tr_max=32: multi-tile reduction + in-kernel mask
    cases = [
        ((2, 4, 16, 16), jnp.float32, {}),
        ((2, 3, 17, 13), jnp.float32, {}),
        ((2, 1, 65, 67), jnp.float32, {"tr_max": 32}),
        ((2, 4, 16, 16), jnp.bfloat16, {}),
    ]
    for shape, dtype, kwargs in cases:
        d_out_S = jax.random.normal(k_s, shape, dtype=jnp.float32).astype(dtype)
        d_out_T = jax.random.normal(k_t, shape, dtype=jnp.float32).astype(dtype)
        for adv_type in ("hinge", "wgan-gp"):
            got = jax.block_until_ready(
                criterion_adv(d_out_S, d_out_T, adv_type, **kwargs))
            want = criterion_adv_ref(d_out_S, d_out_T, adv_type)
            if not jnp.allclose(got, want, atol=1e-5, rtol=1e-5):
                ok = False
                print(f"MISMATCH (shape={shape}, dtype={dtype}, {adv_type}): "
                      f"got={got}, want={want}")

    if ok:
        print("KERNEL_OK")
</pallas_src>

<mosaic_0001>
module attributes {stable_mosaic.version = 11 : i64} {
  func.func @_adv_kernel(%arg0: i32, %arg1: i32, %arg2: memref<16x128xf32, #tpu.memory_space<vmem>>, %arg3: memref<16x128xf32, #tpu.memory_space<vmem>>, %arg4: memref<8x128xf32, #tpu.memory_space<vmem>>) attributes {dimension_semantics = [#tpu.dimension_semantics<arbitrary>, #tpu.dimension_semantics<arbitrary>], iteration_bounds = array<i64: 1, 1>, scalar_prefetch = 0 : i64, scratch_operands = 0 : i64, tpu.core_type = #tpu.core_type<tc>, window_params = [{transform_indices = @transform_0, window_bounds = array<i64: 16, 128>}, {transform_indices = @transform_1, window_bounds = array<i64: 16, 128>}, {transform_indices = @transform_2, window_bounds = array<i64: 8, 128>}]} {
    %c0_i32 = arith.constant 0 : i32
    %0 = arith.cmpi eq, %arg1, %c0_i32 : i32
    %1 = arith.extui %0 : i1 to i32
    %c0_i32_0 = arith.constant 0 : i32
    %2 = arith.cmpi ne, %1, %c0_i32_0 : i32
    scf.if %2 {
      %cst_14 = arith.constant 0.000000e+00 : f32
      %22 = vector.broadcast %cst_14 : f32 to vector<8x128xf32>
      %c0_15 = arith.constant 0 : index
      %c0_16 = arith.constant 0 : index
      %23 = vector.load %arg4[%c0_15, %c0_16] : memref<8x128xf32, #tpu.memory_space<vmem>>, vector<8x128xf32>
      tpu.vector_store %arg4[%c0_15, %c0_16], %22 {strides = array<i32>} : memref<8x128xf32, #tpu.memory_space<vmem>>, vector<8x128xf32>,
    } else {
    }
    %c0 = arith.constant 0 : index
    %c0_1 = arith.constant 0 : index
    %3 = vector.load %arg2[%c0, %c0_1] : memref<16x128xf32, #tpu.memory_space<vmem>>, vector<16x128xf32>
    %c0_2 = arith.constant 0 : index
    %c0_3 = arith.constant 0 : index
    %4 = vector.load %arg3[%c0_2, %c0_3] : memref<16x128xf32, #tpu.memory_space<vmem>>, vector<16x128xf32>
    %cst = arith.constant 1.000000e+00 : f32
    %5 = vector.broadcast %cst : f32 to vector<16x128xf32>
    %6 = arith.subf %5, %4 : vector<16x128xf32>
    %cst_4 = arith.constant 0.000000e+00 : f32
    %7 = vector.broadcast %cst_4 : f32 to vector<16x128xf32>
    %8 = arith.maximumf %6, %7 : vector<16x128xf32>
    %cst_5 = arith.constant 1.000000e+00 : f32
    %9 = vector.broadcast %cst_5 : f32 to vector<16x128xf32>
    %10 = arith.addf %9, %3 : vector<16x128xf32>
    %cst_6 = arith.constant 0.000000e+00 : f32
    %11 = vector.broadcast %cst_6 : f32 to vector<16x128xf32>
    %12 = arith.maximumf %10, %11 : vector<16x128xf32>
    %13 = arith.addf %8, %12 : vector<16x128xf32>
    %c0_7 = arith.constant 0 : index
    %c0_8 = arith.constant 0 : index
    %14 = vector.load %arg4[%c0_7, %c0_8] : memref<8x128xf32, #tpu.memory_space<vmem>>, vector<8x128xf32>
    %15 = vector.shape_cast %13 : vector<16x128xf32> to vector<2x8x128xf32>
    %cst_9 = arith.constant dense<0.000000e+00> : vector<8x128xf32>
    %16 = vector.multi_reduction <add>, %15, %cst_9 [0] : vector<2x8x128xf32> to vector<8x128xf32>
    %17 = arith.addf %14, %16 : vector<8x128xf32>
    %c0_10 = arith.constant 0 : index
    %c0_11 = arith.constant 0 : index
    %18 = vector.load %arg4[%c0_10, %c0_11] : memref<8x128xf32, #tpu.memory_space<vmem>>, vector<8x128xf32>
    tpu.vector_store %arg4[%c0_10, %c0_11], %17 {strides = array<i32>} : memref<8x128xf32, #tpu.memory_space<vmem>>, vector<8x128xf32>,
    %c0_i32_12 = arith.constant 0 : i32
    %19 = arith.cmpi eq, %arg1, %c0_i32_12 : i32
    %20 = arith.extui %19 : i1 to i32
    %c0_i32_13 = arith.constant 0 : i32
    %21 = arith.cmpi ne, %20, %c0_i32_13 : i32
    scf.if %21 {
      %c0_14 = arith.constant 0 : index
      %c0_15 = arith.constant 0 : index
      %22 = vector.load %arg4[%c0_14, %c0_15] : memref<8x128xf32, #tpu.memory_space<vmem>>, vector<8x128xf32>
      %23 = vector.shape_cast %22 : vector<8x128xf32> to vector<1x8x128xf32>
      %cst_16 = arith.constant dense<0.000000e+00> : vector<1xf32>
      %24 = vector.multi_reduction <add>, %23, %cst_16 [1, 2] : vector<1x8x128xf32> to vector<1xf32>
      %25 = vector.shape_cast %24 : vector<1xf32> to vector<1x1x1xf32>
      %26 = vector.extract %25[0, 0, 0] : f32 from vector<1x1x1xf32>
      %cst_17 = arith.constant 4.8828125E-4 : f32
      %27 = arith.mulf %26, %cst_17 : f32
      %28 = tpu.iota {dimensions = array<i32: 0>} : vector<8x128xi32>
      %29 = tpu.iota {dimensions = array<i32: 1>} : vector<8x128xi32>
      %c0_i32_18 = arith.constant 0 : i32
      %30 = vector.broadcast %c0_i32_18 : i32 to vector<8x128xi32>
      %31 = arith.cmpi eq, %28, %30 : vector<8x128xi32>
      %c0_i32_19 = arith.constant 0 : i32
      %32 = vector.broadcast %c0_i32_19 : i32 to vector<8x128xi32>
      %33 = arith.cmpi eq, %29, %32 : vector<8x128xi32>
      %34 = arith.andi %31, %33 : vector<8x128xi1>
      %cst_20 = arith.constant 0.000000e+00 : f32
      %35 = vector.broadcast %27 : f32 to vector<8x128xf32>
      %36 = vector.broadcast %cst_20 : f32 to vector<8x128xf32>
      %37 = arith.select %34, %35, %36 : vector<8x128xi1>, vector<8x128xf32>
      %c0_21 = arith.constant 0 : index
      %c0_22 = arith.constant 0 : index
      %38 = vector.load %arg4[%c0_21, %c0_22] : memref<8x128xf32, #tpu.memory_space<vmem>>, vector<8x128xf32>
      tpu.vector_store %arg4[%c0_21, %c0_22], %37 {strides = array<i32>} : memref<8x128xf32, #tpu.memory_space<vmem>>, vector<8x128xf32>,
    } else {
    }
    return
  }
  func.func @transform_0(%arg0: i32, %arg1: i32) -> (i32, i32) {
    %c1_i32 = arith.constant 1 : i32
    %0 = arith.muli %arg0, %c1_i32 : i32
    %1 = arith.addi %0, %arg1 : i32
    %c0_i32 = arith.constant 0 : i32
    %2 = arith.minsi %1, %c0_i32 : i32
    %c0_i32_0 = arith.constant 0 : i32
    %c0_i32_1 = arith.constant 0 : i32
    return %2, %c0_i32_0 : i32, i32
  }
  func.func @transform_1(%arg0: i32, %arg1: i32) -> (i32, i32) {
    %c1_i32 = arith.constant 1 : i32
    %0 = arith.muli %arg0, %c1_i32 : i32
    %1 = arith.addi %0, %arg1 : i32
    %c0_i32 = arith.constant 0 : i32
    %2 = arith.minsi %1, %c0_i32 : i32
    %c0_i32_0 = arith.constant 0 : i32
    %c0_i32_1 = arith.constant 0 : i32
    return %2, %c0_i32_0 : i32, i32
  }
  func.func @transform_2(%arg0: i32, %arg1: i32) -> (i32, i32) {
    %c0_i32 = arith.constant 0 : i32
    %c0_i32_0 = arith.constant 0 : i32
    return %arg0, %c0_i32 : i32, i32
  }
}

</mosaic_0001>

<llo_original>
// kernel: _criterion_adv_impl.1
$region0: #{_criterion_adv_impl.1}
  #allocation0 [shape = 'u32[]', space=smem, size = 0x4, offset = 0x4, fixed_abs, tag = 'smem constant byte address 0x4 - core index']
  #allocation1 [shape = 'u32[144,128]{1,0:T(1,128)}', space=vmem, size = 0x12000, scoped, tag = 'internal scratch']
  %s0 = inlined_call_operand.vmem [shape: f32[16,128], index: 0, kind: input, shape index: {}]
  %s1 = inlined_call_operand.vmem [shape: f32[16,128], index: 1, kind: input, shape index: {}]
  %s2 = inlined_call_operand.vmem [shape: f32[8,128], index: 2, kind: output, shape index: {}]
  %s3 = sld [smem:[#allocation0]]
  $region26: #{_criterion_adv_impl.1} parent=0
    _
  %s5 = ssub.s32 1, %s3
  %s6 = scalar_select 0, %s5, %s3
  // Predicated region
  $region2: #{_criterion_adv_impl.1} parent=0 // pred_check
    _
  $region3: #{_criterion_adv_impl.1} parent=0 // pred_check_branch
    %8 = sbr.rel (0) target = $region5
  $region4: #{_criterion_adv_impl.1} parent=0 // pred_region
    %s9 = sadd.s32 0, 0
    %p10 = scmp.lt.s32.totalorder %s9, 0
    %s11 = scalar_select %p10, %s9, 0
    %s12 = smul.u32 2, %s11
    %p13 = scmp.lt.s32.totalorder %s12, 1
    %s14 = scalar_select %p13, %s12, 1
    %s15 = smul.addr %s14, 8
    %s16 = scalar_lea.vmem %s0, %s15
    %s17 = sadd.s32 0, 0
    %p18 = scmp.lt.s32.totalorder %s17, 0
    %s19 = scalar_select %p18, %s17, 0
    %s20 = smul.u32 2, %s19
  $region5: #{_criterion_adv_impl.1} parent=0 // pred_fallthru
    _
  // Predicated region
  $region6: #{_criterion_adv_impl.1} parent=0 // pred_check
    _
  $region7: #{_criterion_adv_impl.1} parent=0 // pred_check_branch
    %22 = sbr.rel (0) target = $region9
  $region8: #{_criterion_adv_impl.1} parent=0 // pred_region
    %s23 = sadd.s32 0, 0
    %p24 = scmp.lt.s32.totalorder %s23, 0
    %s25 = scalar_select %p24, %s23, 0
    %s26 = smul.u32 2, %s25
    %p27 = scmp.lt.s32.totalorder %s26, 1
    %s28 = scalar_select %p27, %s26, 1
    %s29 = smul.addr %s28, 8
    %s30 = scalar_lea.vmem %s1, %s29
    %s31 = sadd.s32 0, 0
    %p32 = scmp.lt.s32.totalorder %s31, 0
    %s33 = scalar_select %p32, %s31, 0
    %s34 = smul.u32 2, %s33
  $region9: #{_criterion_adv_impl.1} parent=0 // pred_fallthru
    _
  %s35 = sadd.s32 0, 0
  %p36 = scmp.lt.s32.totalorder %s35, 0
  %s37 = scalar_select %p36, %s35, 0
  %s38 = smul.u32 2, %s37
  %p39 = scmp.lt.s32.totalorder %s38, 1
  %s40 = scalar_select %p39, %s38, 1
  %s41 = smul.addr %s40, 8
  %s42 = scalar_lea.vmem %s0, %s41
  %s43 = sadd.s32 0, 0
  %p44 = scmp.lt.s32.totalorder %s43, 0
  %s45 = scalar_select %p44, %s43, 0
  %s46 = smul.u32 2, %s45
  %p47 = scmp.lt.s32.totalorder %s46, 1
  %s48 = scalar_select %p47, %s46, 1
  %s49 = smul.addr %s48, 8
  %s50 = scalar_lea.vmem %s1, %s49
  %s51 = sadd.s32 0, 0
  %p52 = scmp.lt.s32.totalorder %s51, 0
  %s53 = scalar_select %p52, %s51, 0
  %s54 = smul.u32 2, %s53
  %p55 = scmp.lt.s32.totalorder %s54, 1
  %s56 = scalar_select %p55, %s54, 1
  %s57 = smul.addr %s56, 8
  %s58 = scalar_lea.vmem %s0, %s57
  %s59 = sadd.s32 0, 0
  %p60 = scmp.lt.s32.totalorder %s59, 0
  %s61 = scalar_select %p60, %s59, 0
  %s62 = smul.u32 2, %s61
  %s63 = sadd.s32 0, 0
  %p64 = scmp.lt.s32.totalorder %s63, 0
  %s65 = scalar_select %p64, %s63, 0
  %s66 = smul.u32 2, %s65
  %p67 = scmp.lt.s32.totalorder %s66, 1
  %s68 = scalar_select %p67, %s66, 1
  %s69 = smul.addr %s68, 8
  %s70 = scalar_lea.vmem %s1, %s69
  %s71 = sadd.s32 0, 0
  %p72 = scmp.lt.s32.totalorder %s71, 0
  %s73 = scalar_select %p72, %s71, 0
  %s74 = smul.u32 2, %s73
  %p75 = scmp.eq.s32.totalorder 0, 0
  // Predicated region
  $region10: #{_criterion_adv_impl.1} parent=0 // pred_check
    %p76 = pneg %p75
  $region11: #{_criterion_adv_impl.1} parent=0 // pred_check_branch
    %78 = sbr.rel (%p76) target = $region13
  $region12: #{_criterion_adv_impl.1} parent=0 // pred_region
    %79 = vst [vmem:[%s2] sm:$0xff] 0.0
  $region13: #{_criterion_adv_impl.1} parent=0 // pred_fallthru
    _
  %v80 = vld [vmem:[%s58] sm:$0xff]
  %v81 = vld [vmem:[%s58 + $0x8] sm:$0xff]
  %v82 = vld [vmem:[%s70] sm:$0xff]
  %v83 = vld [vmem:[%s70 + $0x8] sm:$0xff]
  %v84 = vsub.f32 1.0, %v82
  %v85 = vsub.f32 1.0, %v83
  %v86 = vmax.f32 %v84, 0.0
  %v87 = vmax.f32 %v85, 0.0
  %v88 = vadd.f32 %v80, 1.0
  %v89 = vadd.f32 %v81, 1.0
  %v90 = vmax.f32 %v88, 0.0
  %v91 = vmax.f32 %v89, 0.0
  %v92 = vadd.f32 %v86, %v90
  %v93 = vadd.f32 %v87, %v91
  %v94 = vld [vmem:[%s2] sm:$0xff]
  %v95 = vadd.f32 %v92, %v93
  %v96 = vadd.f32 %v94, %v95
  %97 = vst [vmem:[%s2] sm:$0xff] %v96
  // Predicated region
  $region14: #{_criterion_adv_impl.1} parent=0 // pred_check
    %p98 = pneg %p75
  $region15: #{_criterion_adv_impl.1} parent=0 // pred_check_branch
    %100 = sbr.rel (%p98) target = $region17
  $region16: #{_criterion_adv_impl.1} parent=0 // pred_region
    %v101 = vld [vmem:[%s2] sm:$0xff]
    %102 = vadd.xlane.f32.xlu0 %v101
    %v103 = vpop.xlane.xlu0 %102
    %v104 = vrot.slane %v103, 4
    %v105 = vadd.f32 %v103, %v104
    %v106 = vrot.slane %v105, 2
    %v107 = vadd.f32 %v105, %v106
    %v108 = vrot.slane %v107, 1
    %v109 = vadd.f32 %v107, %v108
    %s110 = vtos %v109
    %s111 = smul.f32 %s110, 0.00048828125
    %v112 = vlaneseq
    %v113 = vshrl.u32 %v112, 7
    %v114 = vlaneseq
    %v115 = vand.u32 %v114, 127
    %vm116 = vcmp.eq.s32.totalorder %v113, 0
    %vm117 = vcmp.eq.s32.totalorder %v115, 0
    %vm118 = vmand %vm116, %vm117
    %v119 = vstv %s111
    %v120 = vsel %vm118, %v119, 0.0
    %121 = vst [vmem:[%s2] sm:$0xff] %v120
  $region17: #{_criterion_adv_impl.1} parent=0 // pred_fallthru
    _
  // Predicated region
  $region18: #{_criterion_adv_impl.1} parent=0 // pred_check
    _
  $region19: #{_criterion_adv_impl.1} parent=0 // pred_check_branch
    %123 = sbr.rel (0) target = $region21
  $region20: #{_criterion_adv_impl.1} parent=0 // pred_region
    _
  $region21: #{_criterion_adv_impl.1} parent=0 // pred_fallthru
    _
  // Predicated region
  $region22: #{_criterion_adv_impl.1} parent=0 // pred_check
    _
  $region23: #{_criterion_adv_impl.1} parent=0 // pred_check_branch
    %125 = sbr.rel (0) target = $region25
  $region24: #{_criterion_adv_impl.1} parent=0 // pred_region
    _
  $region25: #{_criterion_adv_impl.1} parent=0 // pred_fallthru
    _

</llo_original>
